<compile_context>
chip_gen: v7x
topology: tpu7x:2x2x1
jax: 0.10.0
libtpu: 0.0.40
codegen_flags: <defaults>
</compile_context>

<pallas_src>
import jax
import jax.numpy as jnp
from jax.experimental import pallas as pl
from jax.experimental.pallas import tpu as pltpu


def _fclinear_kernel(x_ref, wsel_ref, b_ref, o_ref):
    # x_ref:   (tbp, Fp) packed input tile in VMEM.
    # wsel_ref:(Fp, G)  block-diagonal selector (weight row on each diag block),
    #          VMEM-resident across the whole grid (constant index map).
    # b_ref:   (1, 1)   bias scalar in SMEM.
    # o_ref:   (tbp, G) packed output tile.
    x = x_ref[...]
    if x.dtype != jnp.float32:          # trace-time branch (dtype is static)
        x = x.astype(jnp.float32)
    # One MXU dot performs G independent F-long reductions per packed row.
    acc = jnp.dot(x, wsel_ref[...], preferred_element_type=jnp.float32)
    o_ref[...] = (acc + b_ref[0, 0]).astype(o_ref.dtype)


def _pick_block_rows(total_rows, row_bytes, *, target_bytes=4 << 20):
    """Largest packed-row tile (multiple of 8) with ~target_bytes of VMEM per buffer."""
    rows = (target_bytes // max(int(row_bytes), 1)) // 8 * 8
    rows = max(8, int(rows))
    if total_rows <= rows:
        return int(total_rows)          # single full block (legal even if not 8-aligned)
    return rows


def fclinear_forward(x, weight, bias, *, block_rows=None):
    """y = x @ weight.T + bias.  x:(B, F), weight:(1, F), bias:(1,) -> y:(B, 1)."""
    B, F = x.shape
    assert weight.shape == (1, F), weight.shape
    out_dtype = x.dtype

    # Lane-packing factor: fold G consecutive batch rows into one 128-lane row.
    G = (128 // F) if (F <= 128 and 128 % F == 0) else 1
    Fp = G * F

    # Pad the batch to a multiple of G (tail rows dropped after the kernel).
    Bpad = -(-B // G) * G
    if Bpad != B:
        x = jnp.concatenate([x, jnp.zeros((Bpad - B, F), dtype=x.dtype)], axis=0)
    Bp = Bpad // G
    xp = x.reshape(Bp, Fp)              # contiguous reshape: free HBM view

    # Block-diagonal selector (Fp, G): column j carries the weight row on rows
    # [j*F, (j+1)*F).  Pre-cast to f32 once in the wrapper.
    w_f32 = weight.reshape(F).astype(jnp.float32)
    eye = jnp.eye(G, dtype=jnp.float32)
    wsel = (eye[:, None, :] * w_f32[None, :, None]).reshape(Fp, G)

    b2 = jnp.asarray(bias, dtype=jnp.float32).reshape(1, 1)

    itemsize = jnp.dtype(x.dtype).itemsize
    lane_padded = -(-Fp // 128) * 128               # padded lane width in VMEM
    if block_rows is None:
        tbp = _pick_block_rows(Bp, lane_padded * itemsize)
    else:
        tbp = int(block_rows) if int(block_rows) < Bp else Bp
    grid = (pl.cdiv(Bp, tbp),)

    out_itemsize = jnp.dtype(out_dtype).itemsize
    cost = pl.CostEstimate(
        flops=2 * B * F,
        transcendentals=0,
        bytes_accessed=Bp * Fp * itemsize + Bp * G * out_itemsize + Fp * G * 4,
    )

    y_packed = pl.pallas_call(
        _fclinear_kernel,
        out_shape=jax.ShapeDtypeStruct((Bp, G), out_dtype),
        grid_spec=pltpu.PrefetchScalarGridSpec(
            num_scalar_prefetch=0,
            grid=grid,
            in_specs=[
                pl.BlockSpec((tbp, Fp), lambda i: (i, 0)),            # packed x, batch-tiled
                pl.BlockSpec((Fp, G), lambda i: (0, 0)),              # selector, VMEM-resident
                pl.BlockSpec(memory_space=pltpu.MemorySpace.SMEM),    # bias scalar
            ],
            out_specs=pl.BlockSpec((tbp, G), lambda i: (i, 0)),
        ),
        compiler_params=pltpu.CompilerParams(
            dimension_semantics=("parallel",),     # shard batch steps over TCs on v7x
            vmem_limit_bytes=32 * 1024 * 1024,     # ~17 MiB used; safe on v5e/v6e/v7x
        ),
        cost_estimate=cost,
    )(xp, wsel, b2)

    y = y_packed.reshape(Bpad, 1)
    return y[:B] if Bpad != B else y


def fclinear(x, weight, bias, *, min_pallas_rows=32768):
    """Size-thresholded entry: small/medium batches fuse better as a plain XLA dot."""
    if x.shape[0] < min_pallas_rows:
        y = (x.astype(jnp.float32) @ weight.T.astype(jnp.float32)
             + jnp.asarray(bias, jnp.float32))
        return y.astype(x.dtype).reshape(x.shape[0], 1)
    return fclinear_forward(x, weight, bias)


if __name__ == "__main__":
    key = jax.random.PRNGKey(0)
    k_x, k_w, k_b, k_x2, k_x3, k_w3, k_b3 = jax.random.split(key, 7)

    input_size = 32  # inputSize of FClinear
    bound = 1.0 / (input_size ** 0.5)

    # nn.Linear(inputSize, 1) parameters in PyTorch layout: weight (1, F), bias (1,).
    w = jax.random.uniform(k_w, (1, input_size), jnp.float32, -bound, bound)
    b = jax.random.uniform(k_b, (1,), jnp.float32, -bound, bound)

    # Small single-block case (lane-packed path, G=4).
    x = jax.random.normal(k_x, (8, input_size), dtype=jnp.float32)
    y = jax.block_until_ready(fclinear_forward(x, w, b))
    y_ref = x @ w.T + b
    assert y.shape == (8, 1)
    assert jnp.allclose(y, y_ref, atol=1e-5, rtol=1e-5)

    # Multi-step grid with batch padding: 41 rows -> padded to 44 -> 11 packed
    # rows of 128 lanes; block_rows=8 gives 2 grid steps with a partial block.
    x2 = jax.random.normal(k_x2, (41, input_size), dtype=jnp.float32)
    y2 = jax.block_until_ready(fclinear_forward(x2, w, b, block_rows=8))
    y2_ref = x2 @ w.T + b
    assert y2.shape == (41, 1)
    assert jnp.allclose(y2, y2_ref, atol=1e-5, rtol=1e-5)

    # Feature size that does not divide 128 -> unpacked (G=1) fallback path.
    f3 = 96
    bound3 = 1.0 / (f3 ** 0.5)
    w3 = jax.random.uniform(k_w3, (1, f3), jnp.float32, -bound3, bound3)
    b3 = jax.random.uniform(k_b3, (1,), jnp.float32, -bound3, bound3)
    x3 = jax.random.normal(k_x3, (16, f3), dtype=jnp.float32)
    y3 = jax.block_until_ready(fclinear_forward(x3, w3, b3))
    y3_ref = x3 @ w3.T + b3
    assert y3.shape == (16, 1)
    assert jnp.allclose(y3, y3_ref, atol=1e-5, rtol=1e-5)

    print("KERNEL_OK")
</pallas_src>

<mosaic_0001>
module attributes {stable_mosaic.version = 11 : i64} {
  func.func @_fclinear_kernel(%arg0: i32, %arg1: memref<2x128xf32, #tpu.memory_space<vmem>>, %arg2: memref<128x4xf32, #tpu.memory_space<vmem>>, %arg3: memref<1x1xf32, #tpu.memory_space<smem>>, %arg4: memref<2x4xf32, #tpu.memory_space<vmem>>) attributes {dimension_semantics = [#tpu.dimension_semantics<parallel>], iteration_bounds = array<i64: 1>, scalar_prefetch = 0 : i64, scratch_operands = 0 : i64, tpu.core_type = #tpu.core_type<tc>, window_params = [{transform_indices = @transform_0, window_bounds = array<i64: 2, 128>}, {pipeline_mode = #tpu.pipeline_mode<synchronous>, transform_indices = @transform_1, window_bounds = array<i64: 128, 4>}, {transform_indices = @transform_2, window_bounds = array<i64: 1, 1>}, {transform_indices = @transform_3, window_bounds = array<i64: 2, 4>}]} {
    %c0 = arith.constant 0 : index
    %c0_0 = arith.constant 0 : index
    %0 = vector.load %arg1[%c0, %c0_0] : memref<2x128xf32, #tpu.memory_space<vmem>>, vector<2x128xf32>
    %c0_1 = arith.constant 0 : index
    %c0_2 = arith.constant 0 : index
    %1 = vector.load %arg2[%c0_1, %c0_2] : memref<128x4xf32, #tpu.memory_space<vmem>>, vector<128x4xf32>
    %cst = arith.constant dense<0.000000e+00> : vector<2x4xf32>
    %2 = tpu.matmul %0, %1, %cst {dimension_numbers = #tpu.dot_dimension_numbers<[1], [0], [0], [1], [0, 0, 1, 1], [], []>} : vector<2x128xf32>, vector<128x4xf32>, vector<2x4xf32> -> vector<2x4xf32>
    %c0_3 = arith.constant 0 : index
    %c0_4 = arith.constant 0 : index
    %3 = memref.load %arg3[%c0_3, %c0_4] : memref<1x1xf32, #tpu.memory_space<smem>>
    %4 = vector.broadcast %3 : f32 to vector<2x4xf32>
    %5 = arith.addf %2, %4 : vector<2x4xf32>
    %c0_5 = arith.constant 0 : index
    %c0_6 = arith.constant 0 : index
    %6 = vector.load %arg4[%c0_5, %c0_6] : memref<2x4xf32, #tpu.memory_space<vmem>>, vector<2x4xf32>
    tpu.vector_store %arg4[%c0_5, %c0_6], %5 {strides = array<i32>} : memref<2x4xf32, #tpu.memory_space<vmem>>, vector<2x4xf32>,
    return
  }
  func.func @transform_0(%arg0: i32) -> (i32, i32) {
    %c0_i32 = arith.constant 0 : i32
    %c0_i32_0 = arith.constant 0 : i32
    return %arg0, %c0_i32 : i32, i32
  }
  func.func @transform_1(%arg0: i32) -> (i32, i32) {
    %c0_i32 = arith.constant 0 : i32
    %c0_i32_0 = arith.constant 0 : i32
    %c0_i32_1 = arith.constant 0 : i32
    return %c0_i32, %c0_i32_0 : i32, i32
  }
  func.func @transform_2(%arg0: i32) -> (i32, i32) {
    %c0_i32 = arith.constant 0 : i32
    %c0_i32_0 = arith.constant 0 : i32
    %c0_i32_1 = arith.constant 0 : i32
    return %c0_i32, %c0_i32_0 : i32, i32
  }
  func.func @transform_3(%arg0: i32) -> (i32, i32) {
    %c0_i32 = arith.constant 0 : i32
    %c0_i32_0 = arith.constant 0 : i32
    return %arg0, %c0_i32 : i32, i32
  }
}

</mosaic_0001>

<llo_original>
// kernel: tpu_custom_call.1
$region0: #{tpu_custom_call.1}
  #allocation0 [shape = 'u32[]', space=smem, size = 0x4, offset = 0x4, fixed_abs, tag = 'smem constant byte address 0x4 - core index']
  #allocation1 [shape = 'u32[144,128]{1,0:T(1,128)}', space=vmem, size = 0x12000, scoped, tag = 'internal scratch']
  #allocation2 [shape = 'f32[1,1]{1,0:T(1,128)S(6)}', space=smem, size = 0x200, scoped, tag = 'scoped memory for tpu_custom_call.1']
  %s0 = inlined_call_operand.vmem [shape: f32[2,128], index: 0, kind: input, shape index: {}]
  %s1 = inlined_call_operand.vmem [shape: f32[128,4], index: 1, kind: input, shape index: {}]
  %s2 = inlined_call_operand.<no memory space> [shape: f32[1,1], index: 2, kind: input, shape index: {}]
  %s3 = inlined_call_operand.hbm [shape: f32[2,4], index: 3, kind: output, shape index: {}]
  %s4 = sld [smem:[#allocation0]]
  $region22: #{tpu_custom_call.1} parent=0
    _
  %s6 = ssub.s32 1, %s4
  %s7 = scalar_select 0, %s6, %s4
  %8 = sst [smem:[#allocation2]] %s2
  $region1: #{tpu_custom_call.1} parent=0
    #allocation3 [shape = 'u8[1024]{0}', space=vmem, size = 0x400, scoped, tag = 'output window, operand 0, single buffered']
    #allocation4 [shape = 's32[1]{0}', space=sflag, size = 0x4, scoped, tag = 'scoped memory for tpu_custom_call.1']
    %9 = vsyncpa [#allocation4], 0
    // Predicated region
    $region2: #{tpu_custom_call.1} parent=1 // pred_check
      _
    $region3: #{tpu_custom_call.1} parent=1 // pred_check_branch
      %11 = sbr.rel (0) target = $region5
    $region4: #{tpu_custom_call.1} parent=1 // pred_region
      _
    $region5: #{tpu_custom_call.1} parent=1 // pred_fallthru
      _
    // Predicated region
    $region6: #{tpu_custom_call.1} parent=1 // pred_check
      _
    $region7: #{tpu_custom_call.1} parent=1 // pred_check_branch
      %13 = sbr.rel (0) target = $region9
    $region8: #{tpu_custom_call.1} parent=1 // pred_region
      _
    $region9: #{tpu_custom_call.1} parent=1 // pred_fallthru
      _
    // Predicated region
    $region10: #{tpu_custom_call.1} parent=1 // pred_check
      _
    $region11: #{tpu_custom_call.1} parent=1 // pred_check_branch
      %15 = sbr.rel (0) target = $region13
    $region12: #{tpu_custom_call.1} parent=1 // pred_region
      _
    $region13: #{tpu_custom_call.1} parent=1 // pred_fallthru
      _
    %v16 = vld [vmem:[%s0] sm:$0x3]
    %v17 = vld [vmem:[%s1] sm:$0xff]
    %v18 = vld [vmem:[%s1 + $0x8] sm:$0xff]
    %v19 = vld [vmem:[%s1 + $0x10] sm:$0xff]
    %v20 = vld [vmem:[%s1 + $0x18] sm:$0xff]
    %v21 = vld [vmem:[%s1 + $0x20] sm:$0xff]
    %v22 = vld [vmem:[%s1 + $0x28] sm:$0xff]
    %v23 = vld [vmem:[%s1 + $0x30] sm:$0xff]
    %v24 = vld [vmem:[%s1 + $0x38] sm:$0xff]
    %v25 = vld [vmem:[%s1 + $0x40] sm:$0xff]
    %v26 = vld [vmem:[%s1 + $0x48] sm:$0xff]
    %v27 = vld [vmem:[%s1 + $0x50] sm:$0xff]
    %v28 = vld [vmem:[%s1 + $0x58] sm:$0xff]
    %v29 = vld [vmem:[%s1 + $0x60] sm:$0xff]
    %v30 = vld [vmem:[%s1 + $0x68] sm:$0xff]
    %v31 = vld [vmem:[%s1 + $0x70] sm:$0xff]
    %v32 = vld [vmem:[%s1 + $0x78] sm:$0xff]
    %s33 = sld [smem:[#allocation2]]
    %v34 = vstv %s33
    %35 = vmatprep.subr.mxu0 0.0
    %36 = vmatpush1.msra.mxu0 %v17
    %37 = vmatprep.subr.mxu0 0.0
    %38 = vmatpush1.msra.mxu0 %v18
    %39 = vmatprep.subr.mxu0 0.0
    %40 = vmatpush1.msra.mxu0 %v19
    %41 = vmatprep.subr.mxu0 0.0
    %42 = vmatpush1.msra.mxu0 %v20
    %43 = vmatprep.subr.mxu0 0.0
    %44 = vmatpush1.msra.mxu0 %v21
    %45 = vmatprep.subr.mxu0 0.0
    %46 = vmatpush1.msra.mxu0 %v22
    %47 = vmatprep.subr.mxu0 0.0
    %48 = vmatpush1.msra.mxu0 %v23
    %49 = vmatprep.subr.mxu0 0.0
    %50 = vmatpush1.msra.mxu0 %v24
    %51 = vmatprep.subr.mxu0 0.0
    %52 = vmatpush1.msra.mxu0 %v25
    %53 = vmatprep.subr.mxu0 0.0
    %54 = vmatpush1.msra.mxu0 %v26
    %55 = vmatprep.subr.mxu0 0.0
    %56 = vmatpush1.msra.mxu0 %v27
    %57 = vmatprep.subr.mxu0 0.0
    %58 = vmatpush1.msra.mxu0 %v28
    %59 = vmatprep.subr.mxu0 0.0
    %60 = vmatpush1.msra.mxu0 %v29
    %61 = vmatprep.subr.mxu0 0.0
    %62 = vmatpush1.msra.mxu0 %v30
    %63 = vmatprep.subr.mxu0 0.0
    %64 = vmatpush1.msra.mxu0 %v31
    %65 = vmatprep.subr.mxu0 0.0
    %66 = vmatpush1.msra.mxu0 %v32
    %67 = vmatprep.subr.mxu0 0.0
    %68 = vmatpush1.msra.mxu0 0.0
    %69 = vmatprep.subr.mxu0 0.0
    %70 = vmatpush1.msra.mxu0 0.0
    %71 = vmatprep.subr.mxu0 0.0
    %72 = vmatpush1.msra.mxu0 0.0
    %73 = vmatprep.subr.mxu0 0.0
    %74 = vmatpush1.msra.mxu0 0.0
    %75 = vmatprep.subr.mxu0 0.0
    %76 = vmatpush1.msra.mxu0 0.0
    %77 = vmatprep.subr.mxu0 0.0
    %78 = vmatpush1.msra.mxu0 0.0
    %79 = vmatprep.subr.mxu0 0.0
    %80 = vmatpush1.msra.mxu0 0.0
    %81 = vmatprep.subr.mxu0 0.0
    %82 = vmatpush1.msra.mxu0 0.0
    %83 = vmatprep.subr.mxu0 0.0
    %84 = vmatpush1.msra.mxu0 0.0
    %85 = vmatprep.subr.mxu0 0.0
    %86 = vmatpush1.msra.mxu0 0.0
    %87 = vmatprep.subr.mxu0 0.0
    %88 = vmatpush1.msra.mxu0 0.0
    %89 = vmatprep.subr.mxu0 0.0
    %90 = vmatpush1.msra.mxu0 0.0
    %91 = vmatprep.subr.mxu0 0.0
    %92 = vmatpush1.msra.mxu0 0.0
    %93 = vmatprep.subr.mxu0 0.0
    %94 = vmatpush1.msra.mxu0 0.0
    %95 = vmatprep.subr.mxu0 0.0
    %96 = vmatpush1.msra.mxu0 0.0
    %97 = vmatprep.subr.mxu0 0.0
    %98 = vmatpush1.msra.mxu0 0.0
    %99 = vmatprep.mubr.f32.mxu0 0.0
    %100 = vmatmul.mubr.f32.gmra.mrb[0].mxu0 %v16
    %v101 = vpop.f32.mrb[0].mxu0
    %v102 = vadd.f32 %v34, %v101
    %v103 = vpop.f32.mrb[0].mxu0
    %104 = vdwg.mxu0
    %vm105 = vcmask 25600
    %106 = vst.msk [vmem:[#allocation3] sm:$0x3] %vm105, %v102
    // Predicated region
    $region14: #{tpu_custom_call.1} parent=1 // pred_check
      _
    $region15: #{tpu_custom_call.1} parent=1 // pred_check_branch
      %108 = sbr.rel (0) target = $region17
    $region16: #{tpu_custom_call.1} parent=1 // pred_region
      %s110 = ssub.s32 32, 32
      %111 = vsyncadd [#allocation4], %s110
      %s113 = sshll.u32 [#allocation3], 4
      %s114 = int_to_ptr.vmem [resolvable:$true] %s113
      %116 = dma.vmem_to_hbm [thread:$0]  %s114, 32, %s3, [#allocation4]
    $region17: #{tpu_custom_call.1} parent=1 // pred_fallthru
      _
    // Predicated region
    $region18: #{tpu_custom_call.1} parent=1 // pred_check
      _
    $region19: #{tpu_custom_call.1} parent=1 // pred_check_branch
      %118 = sbr.rel (0) target = $region21
    $region20: #{tpu_custom_call.1} parent=1 // pred_region
      %119 = dma.done [#allocation4], 32
    $region21: #{tpu_custom_call.1} parent=1 // pred_fallthru
      _
    %120 = vsyncpa [#allocation4], 1

</llo_original>
